<compile_context>
chip_gen: v7x
topology: tpu7x:2x2x1
jax: 0.10.0
libtpu: 0.0.40
codegen_flags: <defaults>
</compile_context>

<pallas_src>
import jax
import jax.numpy as jnp
import numpy as np
from jax.experimental import pallas as pl
from jax.experimental.pallas import tpu as pltpu


LANES = 128            # lane width of a vreg
SUBLANES = 8           # sublane count of a vreg (f32)
MAX_BLOCK_ROWS = 1024  # 1024 * 128 points per grid step (~8 MiB VMEM dbl-buffered)

_PI = float(np.pi)
_HALF_PI = float(np.pi / 2.0)
_TWO_PI = float(2.0 * np.pi)


def _cdiv(a, b):
    return -(-a // b)


def _round_up(a, b):
    return _cdiv(a, b) * b


def _variation_kernel(xy_ref, o_ref):
    # xy_ref: (2, block_rows, 128) float32 — plane 0 = x, plane 1 = y
    #         (one point per lane, lane-dense).
    # o_ref : (6, block_rows, 128) float32 — planes = [x, y, r, r2, theta, phi].
    x = xy_ref[0, :, :]
    y = xy_ref[1, :, :]

    r2 = x * x + y * y            # Variation.r2
    r = jnp.sqrt(r2)              # Variation.r  (== torch.norm(points, dim=1))
    theta = jnp.arctan2(y, x)     # Variation.theta

    # Variation.phi == atan2(x, y) == wrap(pi/2 - atan2(y, x)) into (-pi, pi].
    # Derived from theta to avoid a second arctan2 (EUP/VALU relief on v7x).
    raw = _HALF_PI - theta
    phi = jnp.where(raw > _PI, raw - _TWO_PI, raw)
    # atan2(0, 0) == 0 for both argument orders; preserve exact-origin behaviour
    # (the formula above would otherwise give pi/2 there).
    phi = jnp.where((x == 0.0) & (y == 0.0), 0.0, phi)

    # Direct dense per-plane 128-lane stores (no concatenate / lane shuffles).
    o_ref[0, :, :] = x
    o_ref[1, :, :] = y
    o_ref[2, :, :] = r
    o_ref[3, :, :] = r2
    o_ref[4, :, :] = theta
    o_ref[5, :, :] = phi


@jax.jit
def variation_forward(points):
    """points: (N, 2) float32 -> (N, 6) == stack((x, y, r, r2, theta, phi), dim=1)."""
    n = points.shape[0]
    p = points.astype(jnp.float32)

    # Point index spans sublanes and lanes: rows x 128 dense slabs.
    rows = _cdiv(n, LANES)
    rows8 = _round_up(rows, SUBLANES)

    # Grid sizing: at least 2 steps when there is enough work (v7x: two
    # TensorCores shard the "parallel" axis), and enough steps that a block
    # never exceeds MAX_BLOCK_ROWS.  Rows are then padded only up to
    # block_rows * grid (<= 8 extra rows per step, <1% waste for large N).
    min_steps = 2 if rows8 >= 2 * SUBLANES else 1
    grid = max(min_steps, _cdiv(rows8, MAX_BLOCK_ROWS))
    block_rows = _round_up(_cdiv(rows8, grid), SUBLANES)
    rows_pad = block_rows * grid
    n_pad = rows_pad * LANES

    # Single wrapper pass: pad once and split the interleaved (x, y) columns
    # into one lane-dense (2, rows_pad, 128) slab (the reshape is free).
    # TODO(synk): feeding points.reshape(rows, 256) directly and
    # de-interleaving in-kernel with stride-2 lane loads would remove this
    # transpose pass too (~16 B/point) once strided lane loads are validated.
    xy = jnp.pad(p, ((0, n_pad - n), (0, 0))).T.reshape(2, rows_pad, LANES)

    out = pl.pallas_call(
        _variation_kernel,
        out_shape=jax.ShapeDtypeStruct((6, rows_pad, LANES), jnp.float32),
        grid_spec=pltpu.PrefetchScalarGridSpec(
            num_scalar_prefetch=0,
            grid=(grid,),
            in_specs=[
                pl.BlockSpec((2, block_rows, LANES), lambda i: (0, i, 0)),
            ],
            out_specs=pl.BlockSpec((6, block_rows, LANES), lambda i: (0, i, 0)),
        ),
        compiler_params=pltpu.CompilerParams(
            dimension_semantics=("parallel",)),
    )(xy)

    # (6, rows_pad, 128) -> (6, n_pad) is a free contiguous reshape; the final
    # fused slice+transpose to (N, 6) is the one copy required by the module's
    # output contract (period-6 lane interleave, see header comment).
    return jnp.transpose(out.reshape(6, n_pad)[:, :n], (1, 0))


def _variation_ref(points):
    """Pure-JAX reference mirroring the PyTorch semantics."""
    x = points[:, 0]
    y = points[:, 1]
    r2 = x ** 2 + y ** 2
    r = jnp.sqrt(r2)
    theta = jnp.arctan2(y, x)
    phi = jnp.arctan2(x, y)
    return jnp.stack([x, y, r, r2, theta, phi], axis=1)


if __name__ == "__main__":
    key = jax.random.PRNGKey(0)
    # Not a multiple of 128: exercises tile padding and gives a 2-step grid
    # (both v7x TensorCores active) while staying small.
    N = 2200
    points = jax.random.normal(key, (N, 2), dtype=jnp.float32)

    out = jax.block_until_ready(variation_forward(points))
    ref = _variation_ref(points)

    assert out.shape == (N, 6), out.shape
    max_err = float(jnp.max(jnp.abs(out - ref)))
    assert max_err < 1e-5, max_err

    print("KERNEL_OK")
</pallas_src>

<mosaic_0001>
module attributes {stable_mosaic.version = 11 : i64} {
  func.func @_variation_kernel(%arg0: i32, %arg1: memref<2x16x128xf32, #tpu.memory_space<vmem>>, %arg2: memref<6x16x128xf32, #tpu.memory_space<vmem>>) attributes {dimension_semantics = [#tpu.dimension_semantics<parallel>], iteration_bounds = array<i64: 2>, scalar_prefetch = 0 : i64, scratch_operands = 0 : i64, tpu.core_type = #tpu.core_type<tc>, window_params = [{transform_indices = @transform_0, window_bounds = array<i64: 2, 16, 128>}, {transform_indices = @transform_1, window_bounds = array<i64: 6, 16, 128>}]} {
    %c0 = arith.constant 0 : index
    %c0_0 = arith.constant 0 : index
    %c0_1 = arith.constant 0 : index
    %0 = vector.load %arg1[%c0, %c0_0, %c0_1] : memref<2x16x128xf32, #tpu.memory_space<vmem>>, vector<1x16x128xf32>
    %1 = vector.shape_cast %0 : vector<1x16x128xf32> to vector<16x128xf32>
    %c1 = arith.constant 1 : index
    %c0_2 = arith.constant 0 : index
    %c0_3 = arith.constant 0 : index
    %2 = vector.load %arg1[%c1, %c0_2, %c0_3] : memref<2x16x128xf32, #tpu.memory_space<vmem>>, vector<1x16x128xf32>
    %3 = vector.shape_cast %2 : vector<1x16x128xf32> to vector<16x128xf32>
    %4 = arith.mulf %1, %1 : vector<16x128xf32>
    %5 = arith.mulf %3, %3 : vector<16x128xf32>
    %6 = arith.addf %4, %5 : vector<16x128xf32>
    %7 = math.sqrt %6 : vector<16x128xf32>
    %8 = math.atan2 %3, %1 : vector<16x128xf32>
    %cst = arith.constant 1.57079637 : f32
    %9 = vector.broadcast %cst : f32 to vector<16x128xf32>
    %10 = arith.subf %9, %8 : vector<16x128xf32>
    %cst_4 = arith.constant 3.14159274 : f32
    %11 = vector.broadcast %cst_4 : f32 to vector<16x128xf32>
    %12 = arith.cmpf ogt, %10, %11 : vector<16x128xf32>
    %cst_5 = arith.constant 6.28318548 : f32
    %13 = vector.broadcast %cst_5 : f32 to vector<16x128xf32>
    %14 = arith.subf %10, %13 : vector<16x128xf32>
    %15 = arith.select %12, %14, %10 : vector<16x128xi1>, vector<16x128xf32>
    %cst_6 = arith.constant 0.000000e+00 : f32
    %16 = vector.broadcast %cst_6 : f32 to vector<16x128xf32>
    %17 = arith.cmpf oeq, %1, %16 : vector<16x128xf32>
    %cst_7 = arith.constant 0.000000e+00 : f32
    %18 = vector.broadcast %cst_7 : f32 to vector<16x128xf32>
    %19 = arith.cmpf oeq, %3, %18 : vector<16x128xf32>
    %20 = arith.andi %17, %19 : vector<16x128xi1>
    %cst_8 = arith.constant 0.000000e+00 : f32
    %21 = vector.broadcast %cst_8 : f32 to vector<16x128xf32>
    %22 = arith.select %20, %21, %15 : vector<16x128xi1>, vector<16x128xf32>
    %c0_9 = arith.constant 0 : index
    %c0_10 = arith.constant 0 : index
    %c0_11 = arith.constant 0 : index
    %23 = vector.load %arg2[%c0_9, %c0_10, %c0_11] : memref<6x16x128xf32, #tpu.memory_space<vmem>>, vector<1x16x128xf32>
    %24 = vector.shape_cast %23 : vector<1x16x128xf32> to vector<16x128xf32>
    %25 = vector.shape_cast %1 : vector<16x128xf32> to vector<1x16x128xf32>
    tpu.vector_store %arg2[%c0_9, %c0_10, %c0_11], %25 {strides = array<i32>} : memref<6x16x128xf32, #tpu.memory_space<vmem>>, vector<1x16x128xf32>,
    %c1_12 = arith.constant 1 : index
    %c0_13 = arith.constant 0 : index
    %c0_14 = arith.constant 0 : index
    %26 = vector.load %arg2[%c1_12, %c0_13, %c0_14] : memref<6x16x128xf32, #tpu.memory_space<vmem>>, vector<1x16x128xf32>
    %27 = vector.shape_cast %26 : vector<1x16x128xf32> to vector<16x128xf32>
    %28 = vector.shape_cast %3 : vector<16x128xf32> to vector<1x16x128xf32>
    tpu.vector_store %arg2[%c1_12, %c0_13, %c0_14], %28 {strides = array<i32>} : memref<6x16x128xf32, #tpu.memory_space<vmem>>, vector<1x16x128xf32>,
    %c2 = arith.constant 2 : index
    %c0_15 = arith.constant 0 : index
    %c0_16 = arith.constant 0 : index
    %29 = vector.load %arg2[%c2, %c0_15, %c0_16] : memref<6x16x128xf32, #tpu.memory_space<vmem>>, vector<1x16x128xf32>
    %30 = vector.shape_cast %29 : vector<1x16x128xf32> to vector<16x128xf32>
    %31 = vector.shape_cast %7 : vector<16x128xf32> to vector<1x16x128xf32>
    tpu.vector_store %arg2[%c2, %c0_15, %c0_16], %31 {strides = array<i32>} : memref<6x16x128xf32, #tpu.memory_space<vmem>>, vector<1x16x128xf32>,
    %c3 = arith.constant 3 : index
    %c0_17 = arith.constant 0 : index
    %c0_18 = arith.constant 0 : index
    %32 = vector.load %arg2[%c3, %c0_17, %c0_18] : memref<6x16x128xf32, #tpu.memory_space<vmem>>, vector<1x16x128xf32>
    %33 = vector.shape_cast %32 : vector<1x16x128xf32> to vector<16x128xf32>
    %34 = vector.shape_cast %6 : vector<16x128xf32> to vector<1x16x128xf32>
    tpu.vector_store %arg2[%c3, %c0_17, %c0_18], %34 {strides = array<i32>} : memref<6x16x128xf32, #tpu.memory_space<vmem>>, vector<1x16x128xf32>,
    %c4 = arith.constant 4 : index
    %c0_19 = arith.constant 0 : index
    %c0_20 = arith.constant 0 : index
    %35 = vector.load %arg2[%c4, %c0_19, %c0_20] : memref<6x16x128xf32, #tpu.memory_space<vmem>>, vector<1x16x128xf32>
    %36 = vector.shape_cast %35 : vector<1x16x128xf32> to vector<16x128xf32>
    %37 = vector.shape_cast %8 : vector<16x128xf32> to vector<1x16x128xf32>
    tpu.vector_store %arg2[%c4, %c0_19, %c0_20], %37 {strides = array<i32>} : memref<6x16x128xf32, #tpu.memory_space<vmem>>, vector<1x16x128xf32>,
    %c5 = arith.constant 5 : index
    %c0_21 = arith.constant 0 : index
    %c0_22 = arith.constant 0 : index
    %38 = vector.load %arg2[%c5, %c0_21, %c0_22] : memref<6x16x128xf32, #tpu.memory_space<vmem>>, vector<1x16x128xf32>
    %39 = vector.shape_cast %38 : vector<1x16x128xf32> to vector<16x128xf32>
    %40 = vector.shape_cast %22 : vector<16x128xf32> to vector<1x16x128xf32>
    tpu.vector_store %arg2[%c5, %c0_21, %c0_22], %40 {strides = array<i32>} : memref<6x16x128xf32, #tpu.memory_space<vmem>>, vector<1x16x128xf32>,
    return
  }
  func.func @transform_0(%arg0: i32) -> (i32, i32, i32) {
    %c0_i32 = arith.constant 0 : i32
    %c0_i32_0 = arith.constant 0 : i32
    %c0_i32_1 = arith.constant 0 : i32
    return %c0_i32, %arg0, %c0_i32_0 : i32, i32, i32
  }
  func.func @transform_1(%arg0: i32) -> (i32, i32, i32) {
    %c0_i32 = arith.constant 0 : i32
    %c0_i32_0 = arith.constant 0 : i32
    %c0_i32_1 = arith.constant 0 : i32
    return %c0_i32, %arg0, %c0_i32_0 : i32, i32, i32
  }
}

</mosaic_0001>

<llo_original>
// kernel: variation_forward.1
$region0: #{variation_forward.1}
  #allocation0 [shape = 'u32[]', space=smem, size = 0x4, offset = 0x4, fixed_abs, tag = 'smem constant byte address 0x4 - core index']
  #allocation1 [shape = 'u32[144,128]{1,0:T(1,128)}', space=vmem, size = 0x12000, scoped, tag = 'internal scratch']
  %s0 = inlined_call_operand.vmem [shape: f32[2,32,128], index: 0, kind: input, shape index: {}]
  %s1 = inlined_call_operand.vmem [shape: f32[6,32,128], index: 1, kind: output, shape index: {}]
  %s2 = sld [smem:[#allocation0]]
  $region109: #{variation_forward.1} parent=0
    _
  %s4 = ssub.s32 1, %s2
  %s5 = scalar_select 0, %s4, %s2
  $region1: #{variation_forward.1} parent=0
    #allocation2 [shape = 'u8[32768]{0}', space=vmem, size = 0x8000, scoped, tag = 'input window, operand 0']
    #allocation3 [shape = 'u8[98304]{0}', space=vmem, size = 0x18000, scoped, tag = 'output window, operand 0']
    loop: start=0, step=1, limit=4
    $region2: #{variation_forward.1} parent=1 // loop_pre_header
      _
    $region3: #{variation_forward.1} parent=1 // loop_header
      %s7 = sphi 0, %s11
      %p8 = scmp.ge.s32.totalorder %s7, 4
      %s17 = sphi 0, %s19
      %s20 = sphi 0, %s17
      %s21 = sphi 0, %s20
      %s37 = sphi 0, %s21
      %s43 = sphi 0, %s45
      %s46 = sphi 0, %s43
      %s47 = sphi 0, %s46
      %s63 = sphi 0, %s47
    $region4: #{variation_forward.1} parent=1 // loop_header_branch
      %10 = sbr.rel (%p8) target = $region8
    $region5: #{variation_forward.1} parent=1 // loop_body
      %s12 = ssub.s32 %s7, 1
      %s13 = ssub.s32 %s7, 2
      %s14 = sadd.s32 %s7, 1
      %s15 = ssub.s32 %s7, %s14
      %p16 = scmp.eq.s32.totalorder %s15, 0
      %s18 = sadd.s32 %s17, 1
      %s19 = scalar_select %p16, %s17, %s18
      %p22 = pneg %p16
      %p23 = scmp.eq.s32.totalorder %s7, 1
      %p24 = por %p22, %p23
      %p25 = scmp.ne.s32.totalorder %s17, %s20
      %p26 = scmp.eq.s32.totalorder %s7, 0
      %p27 = por %p25, %p26
      %p28 = scmp.ne.s32.totalorder %s17, %s20
      %p29 = scmp.eq.s32.totalorder %s12, 1
      %p30 = por %p28, %p29
      %p31 = scmp.ne.s32.totalorder %s20, %s21
      %p32 = scmp.eq.s32.totalorder %s12, 0
      %p33 = por %p31, %p32
      %p34 = scmp.ne.s32.totalorder %s20, %s21
      %p35 = scmp.eq.s32.totalorder %s13, 1
      %p36 = por %p34, %p35
      %p38 = scmp.ne.s32.totalorder %s21, %s37
      %p39 = scmp.eq.s32.totalorder %s13, 0
      %p40 = por %p38, %p39
      %s41 = ssub.s32 %s7, %s14
      %p42 = scmp.eq.s32.totalorder %s41, 0
      %s44 = sadd.s32 %s43, 1
      %s45 = scalar_select %p42, %s43, %s44
      %p48 = pneg %p42
      %p49 = scmp.eq.s32.totalorder %s7, 1
      %p50 = por %p48, %p49
      %p51 = scmp.ne.s32.totalorder %s43, %s46
      %p52 = scmp.eq.s32.totalorder %s7, 0
      %p53 = por %p51, %p52
      %p54 = scmp.ne.s32.totalorder %s43, %s46
      %p55 = scmp.eq.s32.totalorder %s12, 1
      %p56 = por %p54, %p55
      %p57 = scmp.ne.s32.totalorder %s46, %s47
      %p58 = scmp.eq.s32.totalorder %s12, 0
      %p59 = por %p57, %p58
      %p60 = scmp.ne.s32.totalorder %s46, %s47
      %p61 = scmp.eq.s32.totalorder %s13, 1
      %p62 = por %p60, %p61
      %p64 = scmp.ne.s32.totalorder %s47, %s63
      %p65 = scmp.eq.s32.totalorder %s13, 0
      %p66 = por %p64, %p65
      %p67 = scmp.le.s32.totalorder 1, %s7
      %p68 = scmp.lt.s32.totalorder %s7, 3
      %p69 = pnand %p67, %p68
      %p70 = pneg %p69
      // Predicated region
      $region9: #{variation_forward.1} parent=5 // pred_check
        _
      $region10: #{variation_forward.1} parent=5 // pred_check_branch
        %72 = sbr.rel (%p69) target = $region12
      $region11: #{variation_forward.1} parent=5 // pred_region
        %s73 = ssub.s32 %s7, 1
      $region12: #{variation_forward.1} parent=5 // pred_fallthru
        _
      %p74 = scmp.lt.s32.totalorder %s7, 2
      // Predicated region
      $region13: #{variation_forward.1} parent=5 // pred_check
        %p75 = pneg %p74
      $region14: #{variation_forward.1} parent=5 // pred_check_branch
        %77 = sbr.rel (%p75) target = $region16
      $region15: #{variation_forward.1} parent=5 // pred_region
        // Predicated region
        $region17: #{variation_forward.1} parent=15 // pred_check
          %p78 = pneg %p27
        $region18: #{variation_forward.1} parent=15 // pred_check_branch
          %80 = sbr.rel (%p78) target = $region20
        $region19: #{variation_forward.1} parent=15 // pred_region
          %s81 = sand.u32 %s17, 1
          %s82 = sand.u32 %s17, 1
          %s83 = smul.addr %s82, 32
          %s84 = scalar_lea.vmem [#allocation2], %s83
          %s85 = smul.u32 2, %s7
          %s86 = smul.addr %s85, 8
          %s87 = scalar_lea.vmem %s0, %s86
          // Predicated region
          $region21: #{variation_forward.1} parent=19 // pred_check
            _
          $region22: #{variation_forward.1} parent=19 // pred_check_branch
            %89 = sbr.rel (0) target = $region24
          $region23: #{variation_forward.1} parent=19 // pred_region
            // Predicated region
            $region25: #{variation_forward.1} parent=23 // pred_check
              _
            $region26: #{variation_forward.1} parent=23 // pred_check_branch
              %91 = sbr.rel (0) target = $region28
            $region27: #{variation_forward.1} parent=23 // pred_region
              // Predicated region
              $region40: #{variation_forward.1} parent=27 // pred_check
                _
              $region41: #{variation_forward.1} parent=27 // pred_check_branch
                %112 = sbr.rel (0) target = $region43
              $region42: #{variation_forward.1} parent=27 // pred_region
                loop: start=0, step=1, limit=1
                $region44: #{variation_forward.1} parent=42 // loop_pre_header
                  _
                $region45: #{variation_forward.1} parent=42 // loop_header
                  %s114 = sphi 0, %s118
                  %p115 = scmp.ge.s32.totalorder %s114, 1
                  %s119 = sphi %s87, %s87
                  %s120 = sphi %s84, %s84
                $region46: #{variation_forward.1} parent=42 // loop_header_branch
                  %117 = sbr.rel (%p115) target = $region50
                $region47: #{variation_forward.1} parent=42 // loop_body
                  %v121 = vld [vmem:[%s119] sm:$0xff]
                  %122 = vst [vmem:[%s120] sm:$0xff] %v121
                  %v123 = vld [vmem:[%s119 + $0x8] sm:$0xff]
                  %124 = vst [vmem:[%s120 + $0x8] sm:$0xff] %v123
                  %v125 = vld [vmem:[%s119 + $0x20] sm:$0xff]
                  %126 = vst [vmem:[%s120 + $0x10] sm:$0xff] %v125
                  %v127 = vld [vmem:[%s119 + $0x28] sm:$0xff]
                  %128 = vst [vmem:[%s120 + $0x18] sm:$0xff] %v127
                $region48: #{variation_forward.1} parent=42 // loop_footer
                  %s118 = sadd.s32 1, %s114
                $region49: #{variation_forward.1} parent=42 // loop_footer_branch
                  %113 = sbr.rel target = $region45
                $region50: #{variation_forward.1} parent=42 // loop_exit
                  _
              $region43: #{variation_forward.1} parent=27 // pred_fallthru
                _
              // Predicated region
              $region51: #{variation_forward.1} parent=27 // pred_check
                _
              $region52: #{variation_forward.1} parent=27 // pred_check_branch
                %130 = sbr.rel target = $region54
              $region53: #{variation_forward.1} parent=27 // pred_region
                _
              $region54: #{variation_forward.1} parent=27 // pred_fallthru
                _
            $region28: #{variation_forward.1} parent=23 // pred_fallthru
              _
            // Predicated region
            $region29: #{variation_forward.1} parent=23 // pred_check
              _
            $region30: #{variation_forward.1} parent=23 // pred_check_branch
              %93 = sbr.rel target = $region32
            $region31: #{variation_forward.1} parent=23 // pred_region
              loop: start=0, step=1, limit=1
              $region33: #{variation_forward.1} parent=31 // loop_pre_header
                _
              $region34: #{variation_forward.1} parent=31 // loop_header
                %s96 = sphi 0, %s100
                %p97 = scmp.ge.s32.totalorder %s96, 1
                %s101 = sphi %s87, %s87
                %s102 = sphi %s84, %s84
              $region35: #{variation_forward.1} parent=31 // loop_header_branch
                %99 = sbr.rel (%p97) target = $region39
              $region36: #{variation_forward.1} parent=31 // loop_body
                %v103 = vld [vmem:[%s101] sm:$0xff]
                %104 = vst [vmem:[%s102] sm:$0xff] %v103
                %v105 = vld [vmem:[%s101 + $0x8] sm:$0xff]
                %106 = vst [vmem:[%s102 + $0x8] sm:$0xff] %v105
                %v107 = vld [vmem:[%s101 + $0x20] sm:$0xff]
                %108 = vst [vmem:[%s102 + $0x10] sm:$0xff] %v107
                %v109 = vld [vmem:[%s101 + $0x28] sm:$0xff]
                %110 = vst [vmem:[%s102 + $0x18] sm:$0xff] %v109
              $region37: #{variation_forward.1} parent=31 // loop_footer
                %s100 = sadd.s32 1, %s96
              $region38: #{variation_forward.1} parent=31 // loop_footer_branch
                %95 = sbr.rel target = $region34
              $region39: #{variation_forward.1} parent=31 // loop_exit
                _
            $region32: #{variation_forward.1} parent=23 // pred_fallthru
              _
          $region24: #{variation_forward.1} parent=19 // pred_fallthru
            _
          %131 = vnop
        $region20: #{variation_forward.1} parent=15 // pred_fallthru
          _
      $region16: #{variation_forward.1} parent=5 // pred_fallthru
        _
      %p132 = scmp.le.s32.totalorder 1, %s7
      %p133 = scmp.lt.s32.totalorder %s7, 3
      %p134 = pnand %p132, %p133
      %p135 = pneg %p134
      // Predicated region
      $region55: #{variation_forward.1} parent=5 // pred_check
        _
      $region56: #{variation_forward.1} parent=5 // pred_check_branch
        %137 = sbr.rel (%p134) target = $region58
      $region57: #{variation_forward.1} parent=5 // pred_region
        %s138 = ssub.s32 %s7, 1
        %s139 = sand.u32 %s20, 1
        %s140 = sand.u32 %s20, 1
        %s141 = smul.addr %s140, 32
        %s142 = scalar_lea.vmem [#allocation2], %s141
        // Predicated region
        $region59: #{variation_forward.1} parent=57 // pred_check
          %p143 = pneg %p33
        $region60: #{variation_forward.1} parent=57 // pred_check_branch
          %145 = sbr.rel (%p143) target = $region62
        $region61: #{variation_forward.1} parent=57 // pred_region
          _
        $region62: #{variation_forward.1} parent=57 // pred_fallthru
          _
        %s146 = sand.u32 %s20, 1
        %s147 = sand.u32 %s20, 1
        %s148 = smul.addr %s147, 32
        %s149 = scalar_lea.vmem [#allocation2], %s148
        %p150 = pneg %p33
        %p151 = pneg %p30
        %p152 = pneg %p59
        %p153 = pneg %p56
        %s154 = sand.u32 %s46, 1
        %s155 = sand.u32 %s46, 1
        %s156 = smul.addr %s155, 96
        %s157 = scalar_lea.vmem [#allocation3], %s156
        %s158 = smul.u32 2, %s12
        %s159 = smul.u32 2, %s12
        %v160 = vld [vmem:[%s142] sm:$0xff]
        %v161 = vld [vmem:[%s142 + $0x8] sm:$0xff]
        %s162 = scalar_lea.vmem %s142, 16 [#allocation2]
        %v163 = vld [vmem:[%s162] sm:$0xff]
        %v164 = vld [vmem:[%s162 + $0x8] sm:$0xff]
        %v165 = vmul.f32 %v160, %v160
        %v166 = vmul.f32 %v161, %v161
        %v167 = vmul.f32 %v163, %v163
        %v168 = vmul.f32 %v164, %v164
        %v169 = vadd.f32 %v165, %v167
        %v170 = vadd.f32 %v166, %v168
        %v171 = vrsqrt.pop %v169
        %v172 = vmul.f32 %v169, %v171
        %vm173 = vcmp.eq.f32.partialorder %v169, inf
        %v174 = vsel %vm173, %v169, %v172
        %vm175 = vcmp.eq.f32.partialorder %v169, 0.0
        %v176 = vand.u32 %v169, 2147483648
        %v177 = vsel %vm175, %v176, %v174
        %v178 = vrsqrt.pop %v170
        %v179 = vmul.f32 %v170, %v178
        %vm180 = vcmp.eq.f32.partialorder %v170, inf
        %v181 = vsel %vm180, %v170, %v179
        %vm182 = vcmp.eq.f32.partialorder %v170, 0.0
        %v183 = vand.u32 %v170, 2147483648
        %v184 = vsel %vm182, %v183, %v181
        %v185 = vand.u32 2147483647, %v160
        %v186 = vand.u32 2147483647, %v163
        %v187 = vmin.f32 %v185, %v186
        %v188 = vmax.f32 %v185, %v186
        %v189 = vrcp.pop %v188
        %v190 = vmul.f32 %v187, %v189
        %v191 = vmul.f32 %v190, %v190
        %v192 = vmul.f32 0.002785687, %v191
        %v193 = vadd.f32 %v192, -0.015866
        %v194 = vmul.f32 %v193, %v191
        %v195 = vadd.f32 %v194, 0.04247222
        %v196 = vmul.f32 %v195, %v191
        %v197 = vadd.f32 %v196, -0.074975304
        %v198 = vmul.f32 %v197, %v191
        %v199 = vadd.f32 %v198, 0.1064488
        %v200 = vmul.f32 %v199, %v191
        %v201 = vadd.f32 %v200, -0.14207031
        %v202 = vmul.f32 %v201, %v191
        %v203 = vadd.f32 %v202, 0.19993454
        %v204 = vmul.f32 %v203, %v191
        %v205 = vadd.f32 %v204, -0.33333147
        %v206 = vmul.f32 %v205, %v191
        %v207 = vmul.f32 %v206, %v190
        %v208 = vadd.f32 %v207, %v190
        %vm209 = vcmp.gt.f32.partialorder %v186, %v185
        %v210 = vsub.f32 1.5707964, %v208
        %v211 = vsel %vm209, %v210, %v208
        %vm212 = vcmp.lt.f32.partialorder %v160, 0.0
        %v213 = vsub.f32 3.1415927, %v211
        %v214 = vsel %vm212, %v213, %v211
        %vm215 = vcmp.lt.s32.totalorder %v160, 0
        %v216 = vsel %vm215, 3.1415927, 0.0
        %vm217 = vcmp.eq.f32.partialorder %v163, 0.0
        %v218 = vsel %vm217, %v216, %v214
        %vm219 = vcmp.ne.f32.partialorder %v160, %v160
        %vm220 = vcmp.ne.f32.partialorder %v163, %v163
        %vm221 = vmor %vm219, %vm220
        %v222 = vsel %vm221, nan, %v218
        %vm223 = vcmp.lt.f32.partialorder %v160, 0.0
        %v224 = vsel %vm223, 2.3561945, 0.7853982
        %vm225 = vcmp.eq.s32.totalorder %v185, inf
        %vm226 = vcmp.eq.s32.totalorder %v186, inf
        %vm227 = vmand %vm225, %vm226
        %v228 = vsel %vm227, %v224, %v222
        %v229 = vand.u32 2147483647, %v228
        %v230 = vand.u32 %v163, 2147483648
        %v231 = vor.u32 %v229, %v230
        %v232 = vand.u32 2147483647, %v161
        %v233 = vand.u32 2147483647, %v164
        %v234 = vmin.f32 %v232, %v233
        %v235 = vmax.f32 %v232, %v233
        %v236 = vrcp.pop %v235
        %v237 = vmul.f32 %v234, %v236
        %v238 = vmul.f32 %v237, %v237
        %v239 = vmul.f32 0.002785687, %v238
        %v240 = vadd.f32 %v239, -0.015866
        %v241 = vmul.f32 %v240, %v238
        %v242 = vadd.f32 %v241, 0.04247222
        %v243 = vmul.f32 %v242, %v238
        %v244 = vadd.f32 %v243, -0.074975304
        %v245 = vmul.f32 %v244, %v238
        %v246 = vadd.f32 %v245, 0.1064488
        %v247 = vmul.f32 %v246, %v238
        %v248 = vadd.f32 %v247, -0.14207031
        %v249 = vmul.f32 %v248, %v238
        %v250 = vadd.f32 %v249, 0.19993454
        %v251 = vmul.f32 %v250, %v238
        %v252 = vadd.f32 %v251, -0.33333147
        %v253 = vmul.f32 %v252, %v238
        %v254 = vmul.f32 %v253, %v237
        %v255 = vadd.f32 %v254, %v237
        %vm256 = vcmp.gt.f32.partialorder %v233, %v232
        %v257 = vsub.f32 1.5707964, %v255
        %v258 = vsel %vm256, %v257, %v255
        %vm259 = vcmp.lt.f32.partialorder %v161, 0.0
        %v260 = vsub.f32 3.1415927, %v258
        %v261 = vsel %vm259, %v260, %v258
        %vm262 = vcmp.lt.s32.totalorder %v161, 0
        %v263 = vsel %vm262, 3.1415927, 0.0
        %vm264 = vcmp.eq.f32.partialorder %v164, 0.0
        %v265 = vsel %vm264, %v263, %v261
        %vm266 = vcmp.ne.f32.partialorder %v161, %v161
        %vm267 = vcmp.ne.f32.partialorder %v164, %v164
        %vm268 = vmor %vm266, %vm267
        %v269 = vsel %vm268, nan, %v265
        %vm270 = vcmp.lt.f32.partialorder %v161, 0.0
        %v271 = vsel %vm270, 2.3561945, 0.7853982
        %vm272 = vcmp.eq.s32.totalorder %v232, inf
        %vm273 = vcmp.eq.s32.totalorder %v233, inf
        %vm274 = vmand %vm272, %vm273
        %v275 = vsel %vm274, %v271, %v269
        %v276 = vand.u32 2147483647, %v275
        %v277 = vand.u32 %v164, 2147483648
        %v278 = vor.u32 %v276, %v277
        %v279 = vsub.f32 1.5707964, %v231
        %v280 = vsub.f32 1.5707964, %v278
        %vm281 = vcmp.gt.f32.partialorder %v279, 3.1415927
        %vm282 = vcmp.gt.f32.partialorder %v280, 3.1415927
        %v283 = vsub.f32 %v279, 6.2831855
        %v284 = vsub.f32 %v280, 6.2831855
        %v285 = vsel %vm281, %v283, %v279
        %v286 = vsel %vm282, %v284, %v280
        %vm287 = vcmp.eq.f32.partialorder %v160, 0.0
        %vm288 = vcmp.eq.f32.partialorder %v161, 0.0
        %vm289 = vcmp.eq.f32.partialorder %v163, 0.0
        %vm290 = vcmp.eq.f32.partialorder %v164, 0.0
        %vm291 = vmand %vm287, %vm289
        %vm292 = vmand %vm288, %vm290
        %v293 = vsel %vm291, 0.0, %v285
        %v294 = vsel %vm292, 0.0, %v286
        %295 = vst [vmem:[%s157] sm:$0xff] %v160
        %296 = vst [vmem:[%s157 + $0x8] sm:$0xff] %v161
        %s297 = scalar_lea.vmem %s157, 16 [#allocation3]
        %298 = vst [vmem:[%s297] sm:$0xff] %v163
        %299 = vst [vmem:[%s297 + $0x8] sm:$0xff] %v164
        %s300 = scalar_lea.vmem %s157, 32 [#allocation3]
        %301 = vst [vmem:[%s300] sm:$0xff] %v177
        %302 = vst [vmem:[%s300 + $0x8] sm:$0xff] %v184
        %s303 = scalar_lea.vmem %s157, 48 [#allocation3]
        %304 = vst [vmem:[%s303] sm:$0xff] %v169
        %305 = vst [vmem:[%s303 + $0x8] sm:$0xff] %v170
        %s306 = scalar_lea.vmem %s157, 64 [#allocation3]
        %307 = vst [vmem:[%s306] sm:$0xff] %v231
        %308 = vst [vmem:[%s306 + $0x8] sm:$0xff] %v278
        %s309 = scalar_lea.vmem %s157, 80 [#allocation3]
        %310 = vst [vmem:[%s309] sm:$0xff] %v293
        %311 = vst [vmem:[%s309 + $0x8] sm:$0xff] %v294
        %s312 = sand.u32 %s46, 1
        %s313 = sand.u32 %s46, 1
        %s314 = smul.addr %s313, 96
        %s315 = scalar_lea.vmem [#allocation3], %s314
        // Predicated region
        $region63: #{variation_forward.1} parent=57 // pred_check
          %p316 = pneg %p56
        $region64: #{variation_forward.1} parent=57 // pred_check_branch
          %318 = sbr.rel (%p316) target = $region66
        $region65: #{variation_forward.1} parent=57 // pred_region
          %s319 = smul.u32 2, %s12
          %s320 = smul.addr %s319, 8
          %s321 = scalar_lea.vmem %s1, %s320
          // Predicated region
          $region67: #{variation_forward.1} parent=65 // pred_check
            _
          $region68: #{variation_forward.1} parent=65 // pred_check_branch
            %323 = sbr.rel (0) target = $region70
          $region69: #{variation_forward.1} parent=65 // pred_region
            // Predicated region
            $region71: #{variation_forward.1} parent=69 // pred_check
              _
            $region72: #{variation_forward.1} parent=69 // pred_check_branch
              %325 = sbr.rel (0) target = $region74
            $region73: #{variation_forward.1} parent=69 // pred_region
              // Predicated region
              $region86: #{variation_forward.1} parent=73 // pred_check
                _
              $region87: #{variation_forward.1} parent=73 // pred_check_branch
                %362 = sbr.rel (0) target = $region89
              $region88: #{variation_forward.1} parent=73 // pred_region
                loop: start=0, step=1, limit=1
                $region90: #{variation_forward.1} parent=88 // loop_pre_header
                  _
                $region91: #{variation_forward.1} parent=88 // loop_header
                  %s364 = sphi 0, %s368
                  %p365 = scmp.ge.s32.totalorder %s364, 1
                  %s369 = sphi %s315, %s315
                  %s370 = sphi %s321, %s321
                $region92: #{variation_forward.1} parent=88 // loop_header_branch
                  %367 = sbr.rel (%p365) target = $region96
                $region93: #{variation_forward.1} parent=88 // loop_body
                  %v371 = vld [vmem:[%s369] sm:$0xff]
                  %372 = vst [vmem:[%s370] sm:$0xff] %v371
                  %v373 = vld [vmem:[%s369 + $0x8] sm:$0xff]
                  %374 = vst [vmem:[%s370 + $0x8] sm:$0xff] %v373
                  %v375 = vld [vmem:[%s369 + $0x10] sm:$0xff]
                  %376 = vst [vmem:[%s370 + $0x20] sm:$0xff] %v375
                  %v377 = vld [vmem:[%s369 + $0x18] sm:$0xff]
                  %378 = vst [vmem:[%s370 + $0x28] sm:$0xff] %v377
                  %v379 = vld [vmem:[%s369 + $0x20] sm:$0xff]
                  %380 = vst [vmem:[%s370 + $0x40] sm:$0xff] %v379
                  %v381 = vld [vmem:[%s369 + $0x28] sm:$0xff]
                  %382 = vst [vmem:[%s370 + $0x48] sm:$0xff] %v381
                  %v383 = vld [vmem:[%s369 + $0x30] sm:$0xff]
                  %384 = vst [vmem:[%s370 + $0x60] sm:$0xff] %v383
                  %v385 = vld [vmem:[%s369 + $0x38] sm:$0xff]
                  %386 = vst [vmem:[%s370 + $0x68] sm:$0xff] %v385
                  %v387 = vld [vmem:[%s369 + $0x40] sm:$0xff]
                  %388 = vst [vmem:[%s370 + $0x80] sm:$0xff] %v387
                  %v389 = vld [vmem:[%s369 + $0x48] sm:$0xff]
                  %390 = vst [vmem:[%s370 + $0x88] sm:$0xff] %v389
                  %v391 = vld [vmem:[%s369 + $0x50] sm:$0xff]
                  %392 = vst [vmem:[%s370 + $0xa0] sm:$0xff] %v391
                  %v393 = vld [vmem:[%s369 + $0x58] sm:$0xff]
                  %394 = vst [vmem:[%s370 + $0xa8] sm:$0xff] %v393
                $region94: #{variation_forward.1} parent=88 // loop_footer
                  %s368 = sadd.s32 1, %s364
                $region95: #{variation_forward.1} parent=88 // loop_footer_branch
                  %363 = sbr.rel target = $region91
                $region96: #{variation_forward.1} parent=88 // loop_exit
                  _
              $region89: #{variation_forward.1} parent=73 // pred_fallthru
                _
              // Predicated region
              $region97: #{variation_forward.1} parent=73 // pred_check
                _
              $region98: #{variation_forward.1} parent=73 // pred_check_branch
                %396 = sbr.rel target = $region100
              $region99: #{variation_forward.1} parent=73 // pred_region
                _
              $region100: #{variation_forward.1} parent=73 // pred_fallthru
                _
            $region74: #{variation_forward.1} parent=69 // pred_fallthru
              _
            // Predicated region
            $region75: #{variation_forward.1} parent=69 // pred_check
              _
            $region76: #{variation_forward.1} parent=69 // pred_check_branch
              %327 = sbr.rel target = $region78
            $region77: #{variation_forward.1} parent=69 // pred_region
              loop: start=0, step=1, limit=1
              $region79: #{variation_forward.1} parent=77 // loop_pre_header
                _
              $region80: #{variation_forward.1} parent=77 // loop_header
                %s330 = sphi 0, %s334
                %p331 = scmp.ge.s32.totalorder %s330, 1
                %s335 = sphi %s315, %s315
                %s336 = sphi %s321, %s321
              $region81: #{variation_forward.1} parent=77 // loop_header_branch
                %333 = sbr.rel (%p331) target = $region85
              $region82: #{variation_forward.1} parent=77 // loop_body
                %v337 = vld [vmem:[%s335] sm:$0xff]
                %338 = vst [vmem:[%s336] sm:$0xff] %v337
                %v339 = vld [vmem:[%s335 + $0x8] sm:$0xff]
                %340 = vst [vmem:[%s336 + $0x8] sm:$0xff] %v339
                %v341 = vld [vmem:[%s335 + $0x10] sm:$0xff]
                %342 = vst [vmem:[%s336 + $0x20] sm:$0xff] %v341
                %v343 = vld [vmem:[%s335 + $0x18] sm:$0xff]
                %344 = vst [vmem:[%s336 + $0x28] sm:$0xff] %v343
                %v345 = vld [vmem:[%s335 + $0x20] sm:$0xff]
                %346 = vst [vmem:[%s336 + $0x40] sm:$0xff] %v345
                %v347 = vld [vmem:[%s335 + $0x28] sm:$0xff]
                %348 = vst [vmem:[%s336 + $0x48] sm:$0xff] %v347
                %v349 = vld [vmem:[%s335 + $0x30] sm:$0xff]
                %350 = vst [vmem:[%s336 + $0x60] sm:$0xff] %v349
                %v351 = vld [vmem:[%s335 + $0x38] sm:$0xff]
                %352 = vst [vmem:[%s336 + $0x68] sm:$0xff] %v351
                %v353 = vld [vmem:[%s335 + $0x40] sm:$0xff]
                %354 = vst [vmem:[%s336 + $0x80] sm:$0xff] %v353
                %v355 = vld [vmem:[%s335 + $0x48] sm:$0xff]
                %356 = vst [vmem:[%s336 + $0x88] sm:$0xff] %v355
                %v357 = vld [vmem:[%s335 + $0x50] sm:$0xff]
                %358 = vst [vmem:[%s336 + $0xa0] sm:$0xff] %v357
                %v359 = vld [vmem:[%s335 + $0x58] sm:$0xff]
                %360 = vst [vmem:[%s336 + $0xa8] sm:$0xff] %v359
              $region83: #{variation_forward.1} parent=77 // loop_footer
                %s334 = sadd.s32 1, %s330
              $region84: #{variation_forward.1} parent=77 // loop_footer_branch
                %329 = sbr.rel target = $region80
              $region85: #{variation_forward.1} parent=77 // loop_exit
                _
            $region78: #{variation_forward.1} parent=69 // pred_fallthru
              _
          $region70: #{variation_forward.1} parent=65 // pred_fallthru
            _
          %397 = vnop
        $region66: #{variation_forward.1} parent=57 // pred_fallthru
          _
      $region58: #{variation_forward.1} parent=5 // pred_fallthru
        _
      %p398 = scmp.le.s32.totalorder 2, %s7
      // Predicated region
      $region101: #{variation_forward.1} parent=5 // pred_check
        %p399 = pneg %p398
      $region102: #{variation_forward.1} parent=5 // pred_check_branch
        %401 = sbr.rel (%p399) target = $region104
      $region103: #{variation_forward.1} parent=5 // pred_region
        %s402 = ssub.s32 %s7, 2
        // Predicated region
        $region105: #{variation_forward.1} parent=103 // pred_check
          %p403 = pneg %p62
        $region106: #{variation_forward.1} parent=103 // pred_check_branch
          %405 = sbr.rel (%p403) target = $region108
        $region107: #{variation_forward.1} parent=103 // pred_region
          %s406 = sand.u32 %s47, 1
          %s407 = sand.u32 %s47, 1
          %s408 = smul.addr %s407, 96
          %s409 = scalar_lea.vmem [#allocation3], %s408
        $region108: #{variation_forward.1} parent=103 // pred_fallthru
          _
      $region104: #{variation_forward.1} parent=5 // pred_fallthru
        _
    $region6: #{variation_forward.1} parent=1 // loop_footer
      %s11 = sadd.s32 1, %s7
    $region7: #{variation_forward.1} parent=1 // loop_footer_branch
      %6 = sbr.rel target = $region3
    $region8: #{variation_forward.1} parent=1 // loop_exit
      _

</llo_original>
